<compile_context>
chip_gen: v6e
topology: v6e:2x2x1
jax: 0.10.0
libtpu: 0.0.40
codegen_flags: <defaults>
</compile_context>

<pallas_src>
import functools

import jax
import jax.numpy as jnp
from jax import lax
from jax.experimental import pallas as pl
from jax.experimental.pallas import tpu as pltpu

_LANES = 128


def _cdiv(a, b):
    return -(-a // b)


def _round_up(x, m):
    return _cdiv(x, m) * m


def _focal_loss_kernel(x_ref, t_ref, out_ref, *, alpha, gamma, total_elems,
                       padded_total, block_rows):
    # out_ref is this partition's (8, 128) partial-sum accumulator; zero it on
    # the partition's first block.
    @pl.when(pl.program_id(1) == 0)
    def _():
        out_ref[...] = jnp.zeros_like(out_ref)

    x = x_ref[...].astype(jnp.float32)
    t = t_ref[...].astype(jnp.float32)

    # Numerically stable BCE-with-logits (same formula PyTorch uses):
    #   bce = max(x, 0) - x*t + log1p(exp(-|x|))
    bce = jnp.maximum(x, 0.0) - x * t + jnp.log1p(jnp.exp(-jnp.abs(x)))

    # Focal modulation: alpha * (1 - exp(-bce))**gamma * bce
    pt = jnp.exp(-bce)
    one_minus_pt = 1.0 - pt
    g = float(gamma)
    if g == float(int(g)) and g >= 0.0:
        mod = lax.integer_pow(one_minus_pt, int(g))  # VPU multiplies, no pow
    else:
        mod = one_minus_pt ** g
    focal = jnp.float32(alpha) * mod * bce

    # Mask out padded elements (only emitted when padding exists).
    if padded_total != total_elems:
        p = pl.program_id(0)
        i = pl.program_id(1)
        base_row = (p * pl.num_programs(1) + i) * block_rows
        row = base_row + lax.broadcasted_iota(jnp.int32, focal.shape, 0)
        lane = lax.broadcasted_iota(jnp.int32, focal.shape, 1)
        elem = row * _LANES + lane
        focal = jnp.where(elem < total_elems, focal, 0.0)

    # Fold the (block_rows, 128) tile into a single (8, 128) vreg of partial
    # sums -- pure VPU adds, no cross-lane traffic inside the hot loop.
    out_ref[...] += focal.reshape(block_rows // 8, 8, _LANES).sum(axis=0)


def focal_loss(inputs, targets, *, alpha=1.0, gamma=2.0, block_rows=512,
               num_partitions=2):
    """Focal loss (mean reduction) computed with a Pallas TPU kernel.

    inputs, targets: same shape (any rank); logits and targets in [0, 1].
    Returns a scalar float32.
    """
    assert inputs.shape == targets.shape
    total = int(inputs.size)

    rows = _cdiv(total, _LANES)
    P = max(1, int(num_partitions))

    # Effective block: as large as requested but no larger than the problem,
    # always a multiple of 8 sublanes. 512 rows = 256 KiB/input/tile; with
    # 2 inputs x 2 pipeline buffers ~1 MiB VMEM -- safe on v5e/v6e/v7x.
    blk = max(8, min(int(block_rows), _round_up(_cdiv(rows, P), 8)))
    blk = _round_up(blk, 8)

    rows_padded = _round_up(rows, P * blk)
    padded_total = rows_padded * _LANES
    nblk = rows_padded // (P * blk)

    # TODO(synk): for hard {0,1} targets, passing targets as bf16/int8 would cut
    # HBM read traffic ~1.3x; kept f32 to preserve general soft-label semantics.
    x_flat = inputs.reshape(-1)
    t_flat = targets.reshape(-1)
    if padded_total != total:
        x_flat = jnp.pad(x_flat, (0, padded_total - total))
        t_flat = jnp.pad(t_flat, (0, padded_total - total))
    x2d = x_flat.reshape(rows_padded, _LANES)
    t2d = t_flat.reshape(rows_padded, _LANES)

    kernel = functools.partial(
        _focal_loss_kernel,
        alpha=float(alpha),
        gamma=float(gamma),
        total_elems=total,
        padded_total=padded_total,
        block_rows=blk,
    )

    partials = pl.pallas_call(
        kernel,
        out_shape=jax.ShapeDtypeStruct((P * 8, _LANES), jnp.float32),
        grid_spec=pltpu.PrefetchScalarGridSpec(
            num_scalar_prefetch=0,
            grid=(P, nblk),
            in_specs=[
                pl.BlockSpec((blk, _LANES), lambda p, i: (p * nblk + i, 0)),
                pl.BlockSpec((blk, _LANES), lambda p, i: (p * nblk + i, 0)),
            ],
            out_specs=pl.BlockSpec((8, _LANES), lambda p, i: (p, 0)),
        ),
        compiler_params=pltpu.CompilerParams(
            dimension_semantics=("parallel", "arbitrary"),
        ),
    )(x2d, t2d)

    # Single cross-lane/sublane reduce of the (P*8, 128) partials, then mean.
    return jnp.sum(partials) / jnp.float32(total)


def focal_loss_ref(inputs, targets, alpha=1.0, gamma=2.0):
    """Pure-JAX reference mirroring the PyTorch module."""
    x = inputs.astype(jnp.float32)
    t = targets.astype(jnp.float32)
    bce = jnp.maximum(x, 0.0) - x * t + jnp.log1p(jnp.exp(-jnp.abs(x)))
    pt = jnp.exp(-bce)
    return jnp.mean(alpha * (1.0 - pt) ** gamma * bce)


if __name__ == "__main__":
    key = jax.random.PRNGKey(0)
    k1, k2, k3, k4 = jax.random.split(key, 4)

    # NCHW logits/targets, consistent with segmentation-style FocalLoss usage.
    B, C, H, W = 2, 4, 16, 16  # 2048 elements
    inputs = jax.random.normal(k1, (B, C, H, W), dtype=jnp.float32)
    targets = jax.random.bernoulli(k2, 0.5, (B, C, H, W)).astype(jnp.float32)

    out = jax.block_until_ready(focal_loss(inputs, targets, alpha=1.0, gamma=2.0))
    ref = focal_loss_ref(inputs, targets, alpha=1.0, gamma=2.0)
    assert jnp.allclose(out, ref, rtol=1e-5, atol=1e-6), (out, ref)

    # Ragged size: exercises the zero-padding + in-kernel mask path.
    shape2 = (2, 3, 7, 5)  # 210 elements, not a multiple of 128
    x2 = jax.random.normal(k3, shape2, dtype=jnp.float32)
    t2 = jax.random.bernoulli(k4, 0.5, shape2).astype(jnp.float32)
    out2 = jax.block_until_ready(focal_loss(x2, t2, alpha=1.0, gamma=2.0))
    ref2 = focal_loss_ref(x2, t2, alpha=1.0, gamma=2.0)
    assert jnp.allclose(out2, ref2, rtol=1e-5, atol=1e-6), (out2, ref2)

    print("KERNEL_OK")
</pallas_src>

<mosaic_0001>
module attributes {stable_mosaic.version = 11 : i64} {
  func.func @_focal_loss_kernel(%arg0: i32, %arg1: i32, %arg2: memref<8x128xf32, #tpu.memory_space<vmem>>, %arg3: memref<8x128xf32, #tpu.memory_space<vmem>>, %arg4: memref<8x128xf32, #tpu.memory_space<vmem>>) attributes {dimension_semantics = [#tpu.dimension_semantics<parallel>, #tpu.dimension_semantics<arbitrary>], iteration_bounds = array<i64: 2, 1>, scalar_prefetch = 0 : i64, scratch_operands = 0 : i64, tpu.core_type = #tpu.core_type<tc>, window_params = [{transform_indices = @transform_0, window_bounds = array<i64: 8, 128>}, {transform_indices = @transform_1, window_bounds = array<i64: 8, 128>}, {transform_indices = @transform_2, window_bounds = array<i64: 8, 128>}]} {
    %c0_i32 = arith.constant 0 : i32
    %0 = arith.cmpi eq, %arg1, %c0_i32 : i32
    %1 = arith.extui %0 : i1 to i32
    %c0_i32_0 = arith.constant 0 : i32
    %2 = arith.cmpi ne, %1, %c0_i32_0 : i32
    scf.if %2 {
      %cst_13 = arith.constant 0.000000e+00 : f32
      %29 = vector.broadcast %cst_13 : f32 to vector<8x128xf32>
      %c0_14 = arith.constant 0 : index
      %c0_15 = arith.constant 0 : index
      %30 = vector.load %arg4[%c0_14, %c0_15] : memref<8x128xf32, #tpu.memory_space<vmem>>, vector<8x128xf32>
      tpu.vector_store %arg4[%c0_14, %c0_15], %29 {strides = array<i32>} : memref<8x128xf32, #tpu.memory_space<vmem>>, vector<8x128xf32>,
    } else {
    }
    %c0 = arith.constant 0 : index
    %c0_1 = arith.constant 0 : index
    %3 = vector.load %arg2[%c0, %c0_1] : memref<8x128xf32, #tpu.memory_space<vmem>>, vector<8x128xf32>
    %c0_2 = arith.constant 0 : index
    %c0_3 = arith.constant 0 : index
    %4 = vector.load %arg3[%c0_2, %c0_3] : memref<8x128xf32, #tpu.memory_space<vmem>>, vector<8x128xf32>
    %cst = arith.constant 0.000000e+00 : f32
    %5 = vector.broadcast %cst : f32 to vector<8x128xf32>
    %6 = arith.maximumf %3, %5 : vector<8x128xf32>
    %7 = arith.mulf %3, %4 : vector<8x128xf32>
    %8 = arith.subf %6, %7 : vector<8x128xf32>
    %9 = math.absf %3 : vector<8x128xf32>
    %cst_4 = arith.constant 0.000000e+00 : f32
    %10 = vector.broadcast %cst_4 : f32 to vector<8x128xf32>
    %11 = arith.subf %10, %9 : vector<8x128xf32>
    %12 = math.exp %11 : vector<8x128xf32>
    %13 = math.log1p %12 : vector<8x128xf32>
    %14 = arith.addf %8, %13 : vector<8x128xf32>
    %cst_5 = arith.constant 0.000000e+00 : f32
    %15 = vector.broadcast %cst_5 : f32 to vector<8x128xf32>
    %16 = arith.subf %15, %14 : vector<8x128xf32>
    %17 = math.exp %16 : vector<8x128xf32>
    %cst_6 = arith.constant 1.000000e+00 : f32
    %18 = vector.broadcast %cst_6 : f32 to vector<8x128xf32>
    %19 = arith.subf %18, %17 : vector<8x128xf32>
    %20 = arith.mulf %19, %19 : vector<8x128xf32>
    %cst_7 = arith.constant 1.000000e+00 : f32
    %21 = vector.broadcast %cst_7 : f32 to vector<8x128xf32>
    %22 = arith.mulf %21, %20 : vector<8x128xf32>
    %23 = arith.mulf %22, %14 : vector<8x128xf32>
    %c0_8 = arith.constant 0 : index
    %c0_9 = arith.constant 0 : index
    %24 = vector.load %arg4[%c0_8, %c0_9] : memref<8x128xf32, #tpu.memory_space<vmem>>, vector<8x128xf32>
    %25 = vector.shape_cast %23 : vector<8x128xf32> to vector<1x8x128xf32>
    %cst_10 = arith.constant dense<0.000000e+00> : vector<8x128xf32>
    %26 = vector.multi_reduction <add>, %25, %cst_10 [0] : vector<1x8x128xf32> to vector<8x128xf32>
    %27 = arith.addf %24, %26 : vector<8x128xf32>
    %c0_11 = arith.constant 0 : index
    %c0_12 = arith.constant 0 : index
    %28 = vector.load %arg4[%c0_11, %c0_12] : memref<8x128xf32, #tpu.memory_space<vmem>>, vector<8x128xf32>
    tpu.vector_store %arg4[%c0_11, %c0_12], %27 {strides = array<i32>} : memref<8x128xf32, #tpu.memory_space<vmem>>, vector<8x128xf32>,
    return
  }
  func.func @transform_0(%arg0: i32, %arg1: i32) -> (i32, i32) {
    %c1_i32 = arith.constant 1 : i32
    %0 = arith.muli %arg0, %c1_i32 : i32
    %1 = arith.addi %0, %arg1 : i32
    %c0_i32 = arith.constant 0 : i32
    %c0_i32_0 = arith.constant 0 : i32
    return %1, %c0_i32 : i32, i32
  }
  func.func @transform_1(%arg0: i32, %arg1: i32) -> (i32, i32) {
    %c1_i32 = arith.constant 1 : i32
    %0 = arith.muli %arg0, %c1_i32 : i32
    %1 = arith.addi %0, %arg1 : i32
    %c0_i32 = arith.constant 0 : i32
    %c0_i32_0 = arith.constant 0 : i32
    return %1, %c0_i32 : i32, i32
  }
  func.func @transform_2(%arg0: i32, %arg1: i32) -> (i32, i32) {
    %c0_i32 = arith.constant 0 : i32
    %c0_i32_0 = arith.constant 0 : i32
    return %arg0, %c0_i32 : i32, i32
  }
}

</mosaic_0001>

<llo_original>
// kernel: tpu_custom_call.1
$region0: #{tpu_custom_call.1}
  #allocation0 [shape = 'u32[]', space=smem, size = 0x4, offset = 0x4, fixed_abs, tag = 'smem constant byte address 0x4 - core index']
  #allocation1 [shape = 'u32[144,128]{1,0:T(1,128)}', space=vmem, size = 0x12000, scoped, tag = 'internal scratch']
  %s0 = inlined_call_operand.hbm [shape: f32[16,128], index: 0, kind: input, shape index: {}]
  %s1 = inlined_call_operand.hbm [shape: f32[16,128], index: 1, kind: input, shape index: {}]
  %s2 = inlined_call_operand.hbm [shape: f32[16,128], index: 2, kind: output, shape index: {}]
  %s3 = sld [smem:[#allocation0]]
  $region53: #{tpu_custom_call.1} parent=0
    _
  %s5 = ssub.s32 1, %s3
  %s6 = scalar_select 0, %s5, %s3
  $region1: #{tpu_custom_call.1} parent=0
    #allocation2 [shape = 'u8[8192]{0}', space=vmem, size = 0x2000, scoped, tag = 'input window, operand 0']
    #allocation3 [shape = 's32[2]{0}', space=sflag, size = 0x8, scoped, tag = 'scoped memory for tpu_custom_call.1']
    #allocation4 [shape = 's32[2]{0}', space=sflag, size = 0x8, scoped, tag = 'scoped memory for tpu_custom_call.1']
    #allocation5 [shape = 'u8[8192]{0}', space=vmem, size = 0x2000, scoped, tag = 'input window, operand 1']
    #allocation6 [shape = 's32[2]{0}', space=sflag, size = 0x8, scoped, tag = 'scoped memory for tpu_custom_call.1']
    #allocation7 [shape = 'u8[8192]{0}', space=vmem, size = 0x2000, scoped, tag = 'output window, operand 0']
    %7 = vsyncpa [#allocation3], 0
    %s8 = scalar_lea.sflag [#allocation3], 1
    %9 = vsyncpa %s8, 0
    %10 = vsyncpa [#allocation6], 0
    %s11 = scalar_lea.sflag [#allocation6], 1
    %12 = vsyncpa %s11, 0
    %13 = vsyncpa [#allocation4], 0
    %s14 = scalar_lea.sflag [#allocation4], 1
    %15 = vsyncpa %s14, 0
    loop: start=0, step=1, limit=4
    $region2: #{tpu_custom_call.1} parent=1 // loop_pre_header
      _
    $region3: #{tpu_custom_call.1} parent=1 // loop_header
      %s17 = sphi 0, %s21
      %p18 = scmp.ge.s32.totalorder %s17, 4
      %s24 = sphi 0, %s36
      %s25 = sphi 0, %s32
      %s26 = sphi 0, %s24
      %s27 = sphi 0, %s25
      %s28 = sphi 0, %s26
      %s29 = sphi 0, %s27
      %s41 = sphi 0, %s43
      %s44 = sphi 0, %s41
      %s45 = sphi 0, %s44
      %s61 = sphi 0, %s45
      %s69 = sphi 0, %s71
      %s72 = sphi 0, %s69
      %s73 = sphi 0, %s72
      %s89 = sphi 0, %s73
      %s95 = sphi 0, %s97
      %s98 = sphi 0, %s95
      %s99 = sphi 0, %s98
      %s115 = sphi 0, %s99
    $region4: #{tpu_custom_call.1} parent=1 // loop_header_branch
      %20 = sbr.rel (%p18) target = $region8
    $region5: #{tpu_custom_call.1} parent=1 // loop_body
      %s22 = ssub.s32 %s17, 1
      %s23 = ssub.s32 %s17, 2
      %s30 = sadd.s32 1, %s25
      %p31 = scmp.ge.s32.totalorder %s30, 1
      %s32 = scalar_select %p31, 0, %s30
      %s33 = sadd.s32 1, %s24
      %s34 = scalar_select %p31, %s33, %s24
      %p35 = scmp.ge.s32.totalorder %s34, 2
      %s36 = scalar_select %p35, 0, %s34
      %s37 = sadd.s32 %s24, %s25
      %s38 = sadd.s32 %s36, %s32
      %s39 = ssub.s32 %s37, %s38
      %p40 = scmp.eq.s32.totalorder %s39, 0
      %s42 = sadd.s32 %s41, 1
      %s43 = scalar_select %p40, %s41, %s42
      %p46 = pneg %p40
      %p47 = scmp.eq.s32.totalorder %s17, 1
      %p48 = por %p46, %p47
      %p49 = scmp.ne.s32.totalorder %s41, %s44
      %p50 = scmp.eq.s32.totalorder %s17, 0
      %p51 = por %p49, %p50
      %p52 = scmp.ne.s32.totalorder %s41, %s44
      %p53 = scmp.eq.s32.totalorder %s22, 1
      %p54 = por %p52, %p53
      %p55 = scmp.ne.s32.totalorder %s44, %s45
      %p56 = scmp.eq.s32.totalorder %s22, 0
      %p57 = por %p55, %p56
      %p58 = scmp.ne.s32.totalorder %s44, %s45
      %p59 = scmp.eq.s32.totalorder %s23, 1
      %p60 = por %p58, %p59
      %p62 = scmp.ne.s32.totalorder %s45, %s61
      %p63 = scmp.eq.s32.totalorder %s23, 0
      %p64 = por %p62, %p63
      %s65 = sadd.s32 %s24, %s25
      %s66 = sadd.s32 %s36, %s32
      %s67 = ssub.s32 %s65, %s66
      %p68 = scmp.eq.s32.totalorder %s67, 0
      %s70 = sadd.s32 %s69, 1
      %s71 = scalar_select %p68, %s69, %s70
      %p74 = pneg %p68
      %p75 = scmp.eq.s32.totalorder %s17, 1
      %p76 = por %p74, %p75
      %p77 = scmp.ne.s32.totalorder %s69, %s72
      %p78 = scmp.eq.s32.totalorder %s17, 0
      %p79 = por %p77, %p78
      %p80 = scmp.ne.s32.totalorder %s69, %s72
      %p81 = scmp.eq.s32.totalorder %s22, 1
      %p82 = por %p80, %p81
      %p83 = scmp.ne.s32.totalorder %s72, %s73
      %p84 = scmp.eq.s32.totalorder %s22, 0
      %p85 = por %p83, %p84
      %p86 = scmp.ne.s32.totalorder %s72, %s73
      %p87 = scmp.eq.s32.totalorder %s23, 1
      %p88 = por %p86, %p87
      %p90 = scmp.ne.s32.totalorder %s73, %s89
      %p91 = scmp.eq.s32.totalorder %s23, 0
      %p92 = por %p90, %p91
      %s93 = ssub.s32 %s24, %s36
      %p94 = scmp.eq.s32.totalorder %s93, 0
      %s96 = sadd.s32 %s95, 1
      %s97 = scalar_select %p94, %s95, %s96
      %p100 = pneg %p94
      %p101 = scmp.eq.s32.totalorder %s17, 1
      %p102 = por %p100, %p101
      %p103 = scmp.ne.s32.totalorder %s95, %s98
      %p104 = scmp.eq.s32.totalorder %s17, 0
      %p105 = por %p103, %p104
      %p106 = scmp.ne.s32.totalorder %s95, %s98
      %p107 = scmp.eq.s32.totalorder %s22, 1
      %p108 = por %p106, %p107
      %p109 = scmp.ne.s32.totalorder %s98, %s99
      %p110 = scmp.eq.s32.totalorder %s22, 0
      %p111 = por %p109, %p110
      %p112 = scmp.ne.s32.totalorder %s98, %s99
      %p113 = scmp.eq.s32.totalorder %s23, 1
      %p114 = por %p112, %p113
      %p116 = scmp.ne.s32.totalorder %s99, %s115
      %p117 = scmp.eq.s32.totalorder %s23, 0
      %p118 = por %p116, %p117
      %p119 = scmp.le.s32.totalorder 1, %s17
      %p120 = scmp.lt.s32.totalorder %s17, 3
      %p121 = pnand %p119, %p120
      %p122 = pneg %p121
      // Predicated region
      $region9: #{tpu_custom_call.1} parent=5 // pred_check
        _
      $region10: #{tpu_custom_call.1} parent=5 // pred_check_branch
        %124 = sbr.rel (%p121) target = $region12
      $region11: #{tpu_custom_call.1} parent=5 // pred_region
        %s125 = ssub.s32 %s17, 1
      $region12: #{tpu_custom_call.1} parent=5 // pred_fallthru
        _
      %p126 = scmp.lt.s32.totalorder %s17, 2
      // Predicated region
      $region13: #{tpu_custom_call.1} parent=5 // pred_check
        %p127 = pneg %p126
      $region14: #{tpu_custom_call.1} parent=5 // pred_check_branch
        %129 = sbr.rel (%p127) target = $region16
      $region15: #{tpu_custom_call.1} parent=5 // pred_region
        // Predicated region
        $region17: #{tpu_custom_call.1} parent=15 // pred_check
          %p130 = pneg %p51
        $region18: #{tpu_custom_call.1} parent=15 // pred_check_branch
          %132 = sbr.rel (%p130) target = $region20
        $region19: #{tpu_custom_call.1} parent=15 // pred_region
          %s133 = sand.u32 %s41, 1
          %s134 = scalar_lea.sflag [#allocation3], %s133
          %s135 = sand.u32 %s41, 1
          %s136 = smul.addr %s135, 8
          %s137 = scalar_lea.vmem [#allocation2], %s136
          %s138 = sadd.s32 %s24, %s25
          %s140 = ssub.s32 128, 128
          %141 = vsyncadd %s134, %s140
          %s142 = smul.addr %s138, 128
          %s143 = scalar_lea.hbm %s0, %s142
          %s145 = sshll.u32 %s137, 4
          %s146 = int_to_ptr.vmem [resolvable:$true] %s145
          %148 = dma.hbm_to_vmem [thread:$0]  %s143, 128, %s146, %s134
        $region20: #{tpu_custom_call.1} parent=15 // pred_fallthru
          _
        // Predicated region
        $region21: #{tpu_custom_call.1} parent=15 // pred_check
          %p149 = pneg %p79
        $region22: #{tpu_custom_call.1} parent=15 // pred_check_branch
          %151 = sbr.rel (%p149) target = $region24
        $region23: #{tpu_custom_call.1} parent=15 // pred_region
          %s152 = sand.u32 %s69, 1
          %s153 = scalar_lea.sflag [#allocation6], %s152
          %s154 = sand.u32 %s69, 1
          %s155 = smul.addr %s154, 8
          %s156 = scalar_lea.vmem [#allocation5], %s155
          %s157 = sadd.s32 %s24, %s25
          %s159 = ssub.s32 128, 128
          %160 = vsyncadd %s153, %s159
          %s161 = smul.addr %s157, 128
          %s162 = scalar_lea.hbm %s1, %s161
          %s164 = sshll.u32 %s156, 4
          %s165 = int_to_ptr.vmem [resolvable:$true] %s164
          %167 = dma.hbm_to_vmem [thread:$0]  %s162, 128, %s165, %s153
        $region24: #{tpu_custom_call.1} parent=15 // pred_fallthru
          _
      $region16: #{tpu_custom_call.1} parent=5 // pred_fallthru
        _
      %p168 = scmp.le.s32.totalorder 1, %s17
      %p169 = scmp.lt.s32.totalorder %s17, 3
      %p170 = pnand %p168, %p169
      %p171 = pneg %p170
      // Predicated region
      $region25: #{tpu_custom_call.1} parent=5 // pred_check
        _
      $region26: #{tpu_custom_call.1} parent=5 // pred_check_branch
        %173 = sbr.rel (%p170) target = $region28
      $region27: #{tpu_custom_call.1} parent=5 // pred_region
        %s174 = ssub.s32 %s17, 1
        %s175 = sand.u32 %s44, 1
        %s176 = scalar_lea.sflag [#allocation3], %s175
        %s177 = sand.u32 %s44, 1
        %s178 = smul.addr %s177, 8
        %s179 = scalar_lea.vmem [#allocation2], %s178
        // Predicated region
        $region29: #{tpu_custom_call.1} parent=27 // pred_check
          %p180 = pneg %p57
        $region30: #{tpu_custom_call.1} parent=27 // pred_check_branch
          %182 = sbr.rel (%p180) target = $region32
        $region31: #{tpu_custom_call.1} parent=27 // pred_region
          %183 = dma.done %s176, 128
        $region32: #{tpu_custom_call.1} parent=27 // pred_fallthru
          _
        %s184 = sand.u32 %s72, 1
        %s185 = scalar_lea.sflag [#allocation6], %s184
        %s186 = sand.u32 %s72, 1
        %s187 = smul.addr %s186, 8
        %s188 = scalar_lea.vmem [#allocation5], %s187
        // Predicated region
        $region33: #{tpu_custom_call.1} parent=27 // pred_check
          %p189 = pneg %p85
        $region34: #{tpu_custom_call.1} parent=27 // pred_check_branch
          %191 = sbr.rel (%p189) target = $region36
        $region35: #{tpu_custom_call.1} parent=27 // pred_region
          %192 = dma.done %s185, 128
        $region36: #{tpu_custom_call.1} parent=27 // pred_fallthru
          _
        %s193 = sand.u32 %s44, 1
        %s194 = scalar_lea.sflag [#allocation3], %s193
        %s195 = sand.u32 %s44, 1
        %s196 = smul.addr %s195, 8
        %s197 = scalar_lea.vmem [#allocation2], %s196
        %p198 = pneg %p57
        %p199 = pneg %p54
        %s200 = sand.u32 %s72, 1
        %s201 = scalar_lea.sflag [#allocation6], %s200
        %s202 = sand.u32 %s72, 1
        %s203 = smul.addr %s202, 8
        %s204 = scalar_lea.vmem [#allocation5], %s203
        %p205 = pneg %p85
        %p206 = pneg %p82
        %p207 = pneg %p111
        %p208 = pneg %p108
        %s209 = sand.u32 %s98, 1
        %s210 = scalar_lea.sflag [#allocation4], %s209
        %s211 = sand.u32 %s98, 1
        %s212 = smul.addr %s211, 8
        %s213 = scalar_lea.vmem [#allocation7], %s212
        %s214 = sadd.s32 %s26, %s27
        %s215 = sadd.s32 %s26, %s27
        %p216 = scmp.eq.s32.totalorder %s27, 0
        // Predicated region
        $region37: #{tpu_custom_call.1} parent=27 // pred_check
          %p217 = pneg %p216
        $region38: #{tpu_custom_call.1} parent=27 // pred_check_branch
          %219 = sbr.rel (%p217) target = $region40
        $region39: #{tpu_custom_call.1} parent=27 // pred_region
          %220 = vst [vmem:[%s213] sm:$0xff] 0.0
        $region40: #{tpu_custom_call.1} parent=27 // pred_fallthru
          _
        %v221 = vld [vmem:[%s179] sm:$0xff]
        %v222 = vld [vmem:[%s188] sm:$0xff]
        %v223 = vmax.f32 %v221, 0.0
        %v224 = vmul.f32 %v221, %v222
        %v225 = vsub.f32 %v223, %v224
        %v226 = vand.u32 2147483647, %v221
        %v227 = vsub.f32 0.0, %v226
        %v228 = vmul.f32 %v227, 1.442695
        %v229 = vpow.pop %v228
        %v230 = vadd.f32 %v229, 1.0
        %v231 = vlog2.pop %v230
        %v232 = vmul.f32 %v231, 0.6931472
        %v233 = vmul.f32 -0.5, %v229
        %v234 = vadd.f32 %v233, 1.0
        %v235 = vmul.f32 %v234, %v229
        %v236 = vand.u32 2147483647, %v229
        %vm237 = vcmp.lt.f32.partialorder %v236, 0.0004427343
        %v238 = vsel %vm237, %v235, %v232
        %v239 = vadd.f32 %v225, %v238
        %v240 = vsub.f32 0.0, %v239
        %v241 = vmul.f32 %v240, 1.442695
        %v242 = vpow.pop %v241
        %v243 = vsub.f32 1.0, %v242
        %v244 = vmul.f32 %v243, %v243
        %v245 = vmul.f32 %v244, %v239
        %v246 = vld [vmem:[%s213] sm:$0xff]
        %v247 = vadd.f32 %v245, 0.0
        %v248 = vadd.f32 %v246, %v247
        %249 = vst [vmem:[%s213] sm:$0xff] %v248
        %s250 = sand.u32 %s98, 1
        %s251 = scalar_lea.sflag [#allocation4], %s250
        %s252 = sand.u32 %s98, 1
        %s253 = smul.addr %s252, 8
        %s254 = scalar_lea.vmem [#allocation7], %s253
        // Predicated region
        $region41: #{tpu_custom_call.1} parent=27 // pred_check
          %p255 = pneg %p108
        $region42: #{tpu_custom_call.1} parent=27 // pred_check_branch
          %257 = sbr.rel (%p255) target = $region44
        $region43: #{tpu_custom_call.1} parent=27 // pred_region
          %s259 = ssub.s32 128, 128
          %260 = vsyncadd %s251, %s259
          %s261 = smul.addr %s26, 128
          %s262 = scalar_lea.hbm %s2, %s261
          %s264 = sshll.u32 %s254, 4
          %s265 = int_to_ptr.vmem [resolvable:$true] %s264
          %267 = dma.vmem_to_hbm [thread:$0]  %s265, 128, %s262, %s251
        $region44: #{tpu_custom_call.1} parent=27 // pred_fallthru
          _
      $region28: #{tpu_custom_call.1} parent=5 // pred_fallthru
        _
      %p268 = scmp.le.s32.totalorder 2, %s17
      // Predicated region
      $region45: #{tpu_custom_call.1} parent=5 // pred_check
        %p269 = pneg %p268
      $region46: #{tpu_custom_call.1} parent=5 // pred_check_branch
        %271 = sbr.rel (%p269) target = $region48
      $region47: #{tpu_custom_call.1} parent=5 // pred_region
        %s272 = ssub.s32 %s17, 2
        // Predicated region
        $region49: #{tpu_custom_call.1} parent=47 // pred_check
          %p273 = pneg %p114
        $region50: #{tpu_custom_call.1} parent=47 // pred_check_branch
          %275 = sbr.rel (%p273) target = $region52
        $region51: #{tpu_custom_call.1} parent=47 // pred_region
          %s276 = sand.u32 %s99, 1
          %s277 = scalar_lea.sflag [#allocation4], %s276
          %s278 = sand.u32 %s99, 1
          %s279 = smul.addr %s278, 8
          %s280 = scalar_lea.vmem [#allocation7], %s279
          %281 = dma.done %s277, 128
        $region52: #{tpu_custom_call.1} parent=47 // pred_fallthru
          _
      $region48: #{tpu_custom_call.1} parent=5 // pred_fallthru
        _
    $region6: #{tpu_custom_call.1} parent=1 // loop_footer
      %s21 = sadd.s32 1, %s17
    $region7: #{tpu_custom_call.1} parent=1 // loop_footer_branch
      %16 = sbr.rel target = $region3
    $region8: #{tpu_custom_call.1} parent=1 // loop_exit
      _
    %282 = vsyncpa [#allocation3], 1
    %s283 = scalar_lea.sflag [#allocation3], 1
    %284 = vsyncpa %s283, 1
    %285 = vsyncpa [#allocation6], 1
    %s286 = scalar_lea.sflag [#allocation6], 1
    %287 = vsyncpa %s286, 1
    %288 = vsyncpa [#allocation4], 1
    %s289 = scalar_lea.sflag [#allocation4], 1
    %290 = vsyncpa %s289, 1

</llo_original>
